<compile_context>
chip_gen: v7x
topology: tpu7x:2x2x1
jax: 0.10.0
libtpu: 0.0.40
codegen_flags: <defaults>
</compile_context>

<pallas_src>
import functools

import jax
import jax.numpy as jnp
from jax import lax
from jax.experimental import pallas as pl
from jax.experimental.pallas import tpu as pltpu

TEMPERATURE = 10.0


def _quant_kernel(thr_hi_ref, thr_lo_ref, emb_ref, out_ref, *,
                  num_high, tile_d, d_total, k):
    """Fused 2-bit / 1-bit soft quantization on one (tile_b, tile_d) block.

    thr_hi_ref: (3, tile_d) f32 per-dim thresholds, already sorted ascending
    thr_lo_ref: (1, tile_d) f32 raw middle threshold, already clipped to the
                global low-slice [min, max]
    emb_ref:    (tile_b, tile_d) embeddings (any float dtype)
    out_ref:    (tile_b, tile_d) quantization levels (same dtype as input)
    """
    dj = pl.program_id(1)
    d_start = dj * tile_d
    d_end = jnp.minimum(d_start + tile_d, d_total)

    e = emb_ref[...].astype(jnp.float32)
    t = thr_hi_ref[...]
    tmin, tmid, tmax = t[0:1, :], t[1:2, :], t[2:3, :]
    tlow = thr_lo_ref[...]

    # --- static classification of which tile kinds exist in this launch ---
    nd = -(-d_total // tile_d)
    starts = [jj * tile_d for jj in range(nd)]
    ends = [min(s + tile_d, d_total) for s in starts]
    exists_high = any(en <= num_high for en in ends)
    exists_low = any(s >= num_high for s in starts)
    exists_mixed = any((en > num_high) and (s < num_high)
                       for s, en in zip(starts, ends))
    n_kinds = int(exists_high) + int(exists_low) + int(exists_mixed)

    def q_high():
        # multi_bit_quantization: sigmoid fences -> softmax(k * p) -> E[level]
        s0 = jax.nn.sigmoid(k * (e - tmin))
        s1 = jax.nn.sigmoid(k * (e - tmid))
        s2 = jax.nn.sigmoid(k * (e - tmax))
        # logits k*p_i are in [0, k] with k = 10, so no max-shift needed.
        e0 = jnp.exp(k * (1.0 - s0))
        e1 = jnp.exp(k * (s0 - s1))
        e2 = jnp.exp(k * (s1 - s2))
        e3 = jnp.exp(k * s2)
        inv = pl.reciprocal(e0 + e1 + e2 + e3, approx=False)
        return (e1 + 2.0 * e2 + 3.0 * e3) * inv

    def q_low():
        # single_bit_quantization: one sigmoid against the clipped threshold
        return jax.nn.sigmoid(k * (e - tlow))

    def emit(cond, fn):
        if n_kinds == 1:          # only one tile kind -> no runtime branch
            fn()
        else:
            pl.when(cond)(fn)

    if exists_high:
        def _write_high():
            out_ref[...] = q_high().astype(out_ref.dtype)
        emit(d_end <= num_high, _write_high)

    if exists_low:
        def _write_low():
            out_ref[...] = q_low().astype(out_ref.dtype)
        emit(d_start >= num_high, _write_low)

    if exists_mixed:
        def _write_mixed():
            col = d_start + lax.broadcasted_iota(jnp.int32, e.shape, 1)
            out_ref[...] = jnp.where(col < num_high, q_high(),
                                     q_low()).astype(out_ref.dtype)
        emit(jnp.logical_and(d_end > num_high, d_start < num_high),
             _write_mixed)


def quantize(embeddings, thresholds, num_high, k=TEMPERATURE, *,
             tile_b=None, tile_d=None):
    """embeddings: (B, D) float, thresholds: (D, 3) float -> (B, D) levels."""
    B, D = embeddings.shape
    num_high = int(num_high)
    assert 0 <= num_high <= D
    assert float(k) < 80.0, "softmax is computed without a max-shift; needs k < 80"

    thr = thresholds.astype(jnp.float32)          # (D, 3)
    thr_sorted = jnp.sort(thr, axis=1).T          # (3, D), sorted per dim
    t_mid = thr[:, 1]                             # raw middle column (as in PyTorch)
    if num_high < D:
        # Global reduction over the low-info slice — hoisted out of the kernel
        # so tiling over B/D stays correct.
        low = embeddings[:, num_high:].astype(jnp.float32)
        t_low = jnp.clip(t_mid, jnp.min(low), jnp.max(low))
    else:
        t_low = t_mid                             # unused by the kernel
    thr_low = t_low[None, :]                      # (1, D)

    if tile_b is None:
        tile_b = B if B <= 1024 else 1024
    if tile_d is None:
        tile_d = D if D <= 512 else 512
    tile_b, tile_d = int(tile_b), int(tile_d)
    assert tile_b == B or tile_b % 8 == 0
    assert tile_d == D or tile_d % 128 == 0

    grid = (pl.cdiv(B, tile_b), pl.cdiv(D, tile_d))

    itemsize = jnp.dtype(embeddings.dtype).itemsize
    cost = pl.CostEstimate(
        flops=20 * B * D,
        transcendentals=8 * B * D,
        bytes_accessed=2 * B * D * itemsize + 4 * D * 4,
    )

    kernel = functools.partial(
        _quant_kernel, num_high=num_high, tile_d=tile_d, d_total=D, k=float(k))

    return pl.pallas_call(
        kernel,
        out_shape=jax.ShapeDtypeStruct((B, D), embeddings.dtype),
        grid=grid,
        in_specs=[
            pl.BlockSpec((3, tile_d), lambda i, j: (0, j)),
            pl.BlockSpec((1, tile_d), lambda i, j: (0, j)),
            pl.BlockSpec((tile_b, tile_d), lambda i, j: (i, j)),
        ],
        out_specs=pl.BlockSpec((tile_b, tile_d), lambda i, j: (i, j)),
        compiler_params=pltpu.CompilerParams(
            dimension_semantics=("parallel", "parallel")),
        cost_estimate=cost,
    )(thr_sorted, thr_low, embeddings)


def reference(embeddings, thresholds, num_high, k=TEMPERATURE):
    """Pure-JAX transcription of the PyTorch forward (eval, binary=False)."""
    embeddings = embeddings.astype(jnp.float32)
    D = embeddings.shape[1]
    high = embeddings[:, :num_high]
    thr_h = jnp.sort(thresholds[:num_high, :], axis=1)
    sig = jax.nn.sigmoid(k * (high[:, :, None] - thr_h[None, :, :]))
    p0 = 1.0 - sig[:, :, 0]
    p1 = sig[:, :, 0] - sig[:, :, 1]
    p2 = sig[:, :, 1] - sig[:, :, 2]
    p3 = sig[:, :, 2]
    probs = jax.nn.softmax(jnp.stack([p0, p1, p2, p3], axis=2) * k, axis=2)
    q_high = jnp.einsum("bdk,k->bd", probs, jnp.arange(4, dtype=jnp.float32))
    if num_high >= D:
        return q_high
    low = embeddings[:, num_high:]
    thr_l = jnp.clip(thresholds[num_high:, 1], low.min(), low.max())
    q_low = jax.nn.sigmoid(k * (low - thr_l[None, :]))
    return jnp.concatenate([q_high, q_low], axis=1)


if __name__ == "__main__":
    key = jax.random.PRNGKey(0)
    k1, k2, k3 = jax.random.split(key, 3)

    # Case 1: module defaults (sample_embeddings=None -> thresholds [-0.5,0,0.5],
    # is_matryoshka=True, binary_dims=8) at the demo shape B=8, D=32.
    B, D, BINARY_DIMS = 8, 32, 8
    NUM_HIGH = D - BINARY_DIMS
    emb = jax.random.normal(k1, (B, D), dtype=jnp.float32)
    thr = jnp.tile(jnp.array([-0.5, 0.0, 0.5], dtype=jnp.float32)[None, :], (D, 1))
    out = quantize(emb, thr, NUM_HIGH)
    jax.block_until_ready(out)
    ref = reference(emb, thr, NUM_HIGH)
    assert out.shape == (B, D) and out.dtype == emb.dtype
    assert jnp.allclose(out, ref, atol=1e-4, rtol=1e-4), \
        float(jnp.max(jnp.abs(out - ref)))

    # Case 2: multi-tile grid (2 x 2) exercising pure-high and pure-low D tiles.
    B2, D2, BIN2 = 16, 256, 128
    NH2 = D2 - BIN2
    emb2 = jax.random.normal(k2, (B2, D2), dtype=jnp.float32)
    thr2 = 0.3 * jax.random.normal(k3, (D2, 3), dtype=jnp.float32)
    out2 = quantize(emb2, thr2, NH2, tile_b=8, tile_d=128)
    jax.block_until_ready(out2)
    ref2 = reference(emb2, thr2, NH2)
    assert jnp.allclose(out2, ref2, atol=1e-4, rtol=1e-4), \
        float(jnp.max(jnp.abs(out2 - ref2)))

    # Case 3: bf16 HBM I/O (compute in f32 inside the kernel only).
    emb3 = emb.astype(jnp.bfloat16)
    out3 = quantize(emb3, thr, NUM_HIGH)
    jax.block_until_ready(out3)
    ref3 = reference(emb3.astype(jnp.float32), thr, NUM_HIGH)
    assert out3.dtype == jnp.bfloat16
    assert jnp.allclose(out3.astype(jnp.float32), ref3, atol=3e-2, rtol=3e-2)

    # Case 4: binary_dims=0 -> pure 2-bit path on every tile.
    out4 = quantize(emb, thr, D)
    jax.block_until_ready(out4)
    ref4 = reference(emb, thr, D)
    assert jnp.allclose(out4, ref4, atol=1e-4, rtol=1e-4)

    print("KERNEL_OK")
</pallas_src>

<mosaic_0001>
module attributes {stable_mosaic.version = 11 : i64} {
  func.func @_quant_kernel(%arg0: i32, %arg1: i32, %arg2: memref<3x32xf32, #tpu.memory_space<vmem>>, %arg3: memref<1x32xf32, #tpu.memory_space<vmem>>, %arg4: memref<8x32xf32, #tpu.memory_space<vmem>>, %arg5: memref<8x32xf32, #tpu.memory_space<vmem>>) attributes {dimension_semantics = [#tpu.dimension_semantics<parallel>, #tpu.dimension_semantics<parallel>], iteration_bounds = array<i64: 1, 1>, scalar_prefetch = 0 : i64, scratch_operands = 0 : i64, tpu.core_type = #tpu.core_type<tc>, window_params = [{transform_indices = @transform_0, window_bounds = array<i64: 3, 32>}, {transform_indices = @transform_1, window_bounds = array<i64: 1, 32>}, {transform_indices = @transform_2, window_bounds = array<i64: 8, 32>}, {transform_indices = @transform_3, window_bounds = array<i64: 8, 32>}]} {
    %c32_i32 = arith.constant 32 : i32
    %0 = arith.muli %arg1, %c32_i32 : i32
    %c0 = arith.constant 0 : index
    %c0_0 = arith.constant 0 : index
    %1 = vector.load %arg4[%c0, %c0_0] : memref<8x32xf32, #tpu.memory_space<vmem>>, vector<8x32xf32>
    %c0_1 = arith.constant 0 : index
    %c0_2 = arith.constant 0 : index
    %2 = vector.load %arg2[%c0_1, %c0_2] : memref<3x32xf32, #tpu.memory_space<vmem>>, vector<3x32xf32>
    %3 = vector.extract_strided_slice %2 {offsets = [0, 0], sizes = [1, 32], strides = [1, 1]} : vector<3x32xf32> to vector<1x32xf32>
    %4 = vector.extract_strided_slice %2 {offsets = [1, 0], sizes = [1, 32], strides = [1, 1]} : vector<3x32xf32> to vector<1x32xf32>
    %5 = vector.extract_strided_slice %2 {offsets = [2, 0], sizes = [1, 32], strides = [1, 1]} : vector<3x32xf32> to vector<1x32xf32>
    %c0_3 = arith.constant 0 : index
    %c0_4 = arith.constant 0 : index
    %6 = vector.load %arg3[%c0_3, %c0_4] : memref<1x32xf32, #tpu.memory_space<vmem>>, vector<1x32xf32>
    %7 = tpu.iota {dimensions = array<i32: 1>} : vector<8x32xi32>
    %8 = vector.broadcast %0 : i32 to vector<8x32xi32>
    %9 = arith.addi %8, %7 : vector<8x32xi32>
    %c24_i32 = arith.constant 24 : i32
    %10 = vector.broadcast %c24_i32 : i32 to vector<8x32xi32>
    %11 = arith.cmpi slt, %9, %10 : vector<8x32xi32>
    %12 = vector.broadcast %3 : vector<1x32xf32> to vector<8x32xf32>
    %13 = arith.subf %1, %12 : vector<8x32xf32>
    %cst = arith.constant 1.000000e+01 : f32
    %14 = vector.broadcast %cst : f32 to vector<8x32xf32>
    %15 = arith.mulf %14, %13 : vector<8x32xf32>
    %16 = arith.negf %15 : vector<8x32xf32>
    %17 = math.exp %16 : vector<8x32xf32>
    %cst_5 = arith.constant 1.000000e+00 : f32
    %18 = vector.broadcast %cst_5 : f32 to vector<8x32xf32>
    %19 = arith.addf %18, %17 : vector<8x32xf32>
    %20 = arith.divf %18, %19 : vector<8x32xf32>
    %21 = vector.broadcast %4 : vector<1x32xf32> to vector<8x32xf32>
    %22 = arith.subf %1, %21 : vector<8x32xf32>
    %cst_6 = arith.constant 1.000000e+01 : f32
    %23 = vector.broadcast %cst_6 : f32 to vector<8x32xf32>
    %24 = arith.mulf %23, %22 : vector<8x32xf32>
    %25 = arith.negf %24 : vector<8x32xf32>
    %26 = math.exp %25 : vector<8x32xf32>
    %cst_7 = arith.constant 1.000000e+00 : f32
    %27 = vector.broadcast %cst_7 : f32 to vector<8x32xf32>
    %28 = arith.addf %27, %26 : vector<8x32xf32>
    %29 = arith.divf %27, %28 : vector<8x32xf32>
    %30 = vector.broadcast %5 : vector<1x32xf32> to vector<8x32xf32>
    %31 = arith.subf %1, %30 : vector<8x32xf32>
    %cst_8 = arith.constant 1.000000e+01 : f32
    %32 = vector.broadcast %cst_8 : f32 to vector<8x32xf32>
    %33 = arith.mulf %32, %31 : vector<8x32xf32>
    %34 = arith.negf %33 : vector<8x32xf32>
    %35 = math.exp %34 : vector<8x32xf32>
    %cst_9 = arith.constant 1.000000e+00 : f32
    %36 = vector.broadcast %cst_9 : f32 to vector<8x32xf32>
    %37 = arith.addf %36, %35 : vector<8x32xf32>
    %38 = arith.divf %36, %37 : vector<8x32xf32>
    %cst_10 = arith.constant 1.000000e+00 : f32
    %39 = vector.broadcast %cst_10 : f32 to vector<8x32xf32>
    %40 = arith.subf %39, %20 : vector<8x32xf32>
    %cst_11 = arith.constant 1.000000e+01 : f32
    %41 = vector.broadcast %cst_11 : f32 to vector<8x32xf32>
    %42 = arith.mulf %41, %40 : vector<8x32xf32>
    %43 = math.exp %42 : vector<8x32xf32>
    %44 = arith.subf %20, %29 : vector<8x32xf32>
    %cst_12 = arith.constant 1.000000e+01 : f32
    %45 = vector.broadcast %cst_12 : f32 to vector<8x32xf32>
    %46 = arith.mulf %45, %44 : vector<8x32xf32>
    %47 = math.exp %46 : vector<8x32xf32>
    %48 = arith.subf %29, %38 : vector<8x32xf32>
    %cst_13 = arith.constant 1.000000e+01 : f32
    %49 = vector.broadcast %cst_13 : f32 to vector<8x32xf32>
    %50 = arith.mulf %49, %48 : vector<8x32xf32>
    %51 = math.exp %50 : vector<8x32xf32>
    %cst_14 = arith.constant 1.000000e+01 : f32
    %52 = vector.broadcast %cst_14 : f32 to vector<8x32xf32>
    %53 = arith.mulf %52, %38 : vector<8x32xf32>
    %54 = math.exp %53 : vector<8x32xf32>
    %55 = arith.addf %43, %47 : vector<8x32xf32>
    %56 = arith.addf %55, %51 : vector<8x32xf32>
    %57 = arith.addf %56, %54 : vector<8x32xf32>
    %58 = tpu.reciprocal %57 : vector<8x32xf32> -> vector<8x32xf32>
    %cst_15 = arith.constant 2.000000e+00 : f32
    %59 = vector.broadcast %cst_15 : f32 to vector<8x32xf32>
    %60 = arith.mulf %59, %51 : vector<8x32xf32>
    %61 = arith.addf %47, %60 : vector<8x32xf32>
    %cst_16 = arith.constant 3.000000e+00 : f32
    %62 = vector.broadcast %cst_16 : f32 to vector<8x32xf32>
    %63 = arith.mulf %62, %54 : vector<8x32xf32>
    %64 = arith.addf %61, %63 : vector<8x32xf32>
    %65 = arith.mulf %64, %58 : vector<8x32xf32>
    %66 = vector.broadcast %6 : vector<1x32xf32> to vector<8x32xf32>
    %67 = arith.subf %1, %66 : vector<8x32xf32>
    %cst_17 = arith.constant 1.000000e+01 : f32
    %68 = vector.broadcast %cst_17 : f32 to vector<8x32xf32>
    %69 = arith.mulf %68, %67 : vector<8x32xf32>
    %70 = arith.negf %69 : vector<8x32xf32>
    %71 = math.exp %70 : vector<8x32xf32>
    %cst_18 = arith.constant 1.000000e+00 : f32
    %72 = vector.broadcast %cst_18 : f32 to vector<8x32xf32>
    %73 = arith.addf %72, %71 : vector<8x32xf32>
    %74 = arith.divf %72, %73 : vector<8x32xf32>
    %75 = arith.select %11, %65, %74 : vector<8x32xi1>, vector<8x32xf32>
    %c0_19 = arith.constant 0 : index
    %c0_20 = arith.constant 0 : index
    %76 = vector.load %arg5[%c0_19, %c0_20] : memref<8x32xf32, #tpu.memory_space<vmem>>, vector<8x32xf32>
    tpu.vector_store %arg5[%c0_19, %c0_20], %75 {strides = array<i32>} : memref<8x32xf32, #tpu.memory_space<vmem>>, vector<8x32xf32>,
    return
  }
  func.func @transform_0(%arg0: i32, %arg1: i32) -> (i32, i32) {
    %c0_i32 = arith.constant 0 : i32
    %c0_i32_0 = arith.constant 0 : i32
    return %c0_i32, %arg1 : i32, i32
  }
  func.func @transform_1(%arg0: i32, %arg1: i32) -> (i32, i32) {
    %c0_i32 = arith.constant 0 : i32
    %c0_i32_0 = arith.constant 0 : i32
    return %c0_i32, %arg1 : i32, i32
  }
  func.func @transform_2(%arg0: i32, %arg1: i32) -> (i32, i32) {
    %c0_i32 = arith.constant 0 : i32
    return %arg0, %arg1 : i32, i32
  }
  func.func @transform_3(%arg0: i32, %arg1: i32) -> (i32, i32) {
    %c0_i32 = arith.constant 0 : i32
    return %arg0, %arg1 : i32, i32
  }
}

</mosaic_0001>

<llo_original>
// kernel: tpu_custom_call.1
$region0: #{tpu_custom_call.1}
  #allocation0 [shape = 'u32[]', space=smem, size = 0x4, offset = 0x4, fixed_abs, tag = 'smem constant byte address 0x4 - core index']
  #allocation1 [shape = 'u32[144,128]{1,0:T(1,128)}', space=vmem, size = 0x12000, scoped, tag = 'internal scratch']
  %s0 = inlined_call_operand.hbm [shape: f32[3,32], index: 0, kind: input, shape index: {}]
  %s1 = inlined_call_operand.vmem [shape: f32[1,32], index: 1, kind: input, shape index: {}]
  %s2 = inlined_call_operand.hbm [shape: f32[8,32], index: 2, kind: input, shape index: {}]
  %s3 = inlined_call_operand.hbm [shape: f32[8,32], index: 3, kind: output, shape index: {}]
  %s4 = sld [smem:[#allocation0]]
  $region30: #{tpu_custom_call.1} parent=0
    _
  %s6 = ssub.s32 1, %s4
  %s7 = scalar_select 0, %s6, %s4
  $region1: #{tpu_custom_call.1} parent=0
    #allocation2 [shape = 'u8[2048]{0}', space=vmem, size = 0x800, scoped, tag = 'input window, operand 0, single buffered']
    #allocation3 [shape = 's32[1]{0}', space=sflag, size = 0x4, scoped, tag = 'scoped memory for tpu_custom_call.1']
    #allocation4 [shape = 's32[1]{0}', space=sflag, size = 0x4, scoped, tag = 'scoped memory for tpu_custom_call.1']
    #allocation5 [shape = 'u8[4096]{0}', space=vmem, size = 0x1000, scoped, tag = 'input window, operand 2, single buffered']
    #allocation6 [shape = 's32[1]{0}', space=sflag, size = 0x4, scoped, tag = 'scoped memory for tpu_custom_call.1']
    #allocation7 [shape = 'u8[4096]{0}', space=vmem, size = 0x1000, scoped, tag = 'output window, operand 0, single buffered']
    %8 = vsyncpa [#allocation3], 0
    %9 = vsyncpa [#allocation6], 0
    %10 = vsyncpa [#allocation4], 0
    // Predicated region
    $region2: #{tpu_custom_call.1} parent=1 // pred_check
      _
    $region3: #{tpu_custom_call.1} parent=1 // pred_check_branch
      %12 = sbr.rel (0) target = $region5
    $region4: #{tpu_custom_call.1} parent=1 // pred_region
      %s14 = ssub.s32 64, 64
      %15 = vsyncadd [#allocation3], %s14
      %s17 = sshll.u32 [#allocation2], 4
      %s18 = int_to_ptr.vmem [resolvable:$true] %s17
      %20 = dma.hbm_to_vmem [thread:$0]  %s0, 64, %s18, [#allocation3]
    $region5: #{tpu_custom_call.1} parent=1 // pred_fallthru
      _
    // Predicated region
    $region6: #{tpu_custom_call.1} parent=1 // pred_check
      _
    $region7: #{tpu_custom_call.1} parent=1 // pred_check_branch
      %22 = sbr.rel (0) target = $region9
    $region8: #{tpu_custom_call.1} parent=1 // pred_region
      _
    $region9: #{tpu_custom_call.1} parent=1 // pred_fallthru
      _
    // Predicated region
    $region10: #{tpu_custom_call.1} parent=1 // pred_check
      _
    $region11: #{tpu_custom_call.1} parent=1 // pred_check_branch
      %24 = sbr.rel (0) target = $region13
    $region12: #{tpu_custom_call.1} parent=1 // pred_region
      %s26 = ssub.s32 128, 128
      %27 = vsyncadd [#allocation6], %s26
      %s29 = sshll.u32 [#allocation5], 4
      %s30 = int_to_ptr.vmem [resolvable:$true] %s29
      %32 = dma.hbm_to_vmem [thread:$0]  %s2, 128, %s30, [#allocation6]
    $region13: #{tpu_custom_call.1} parent=1 // pred_fallthru
      _
    // Predicated region
    $region14: #{tpu_custom_call.1} parent=1 // pred_check
      _
    $region15: #{tpu_custom_call.1} parent=1 // pred_check_branch
      %34 = sbr.rel (0) target = $region17
    $region16: #{tpu_custom_call.1} parent=1 // pred_region
      %35 = dma.done [#allocation3], 64
    $region17: #{tpu_custom_call.1} parent=1 // pred_fallthru
      _
    // Predicated region
    $region18: #{tpu_custom_call.1} parent=1 // pred_check
      _
    $region19: #{tpu_custom_call.1} parent=1 // pred_check_branch
      %37 = sbr.rel (0) target = $region21
    $region20: #{tpu_custom_call.1} parent=1 // pred_region
      %38 = dma.done [#allocation6], 128
    $region21: #{tpu_custom_call.1} parent=1 // pred_fallthru
      _
    %s39 = smul.u32 0, 32
    %v40 = vld [vmem:[#allocation5] sm:$0xff]
    %v41 = vld [vmem:[#allocation2] sm:$0x7]
    %v42 = vld [vmem:[%s1] sm:$0x1]
    %v43 = vlaneseq
    %v44 = vand.u32 %v43, 127
    %v45 = vstv %s39
    %v46 = vadd.s32 %v45, %v44
    %vm47 = vcmp.lt.s32.totalorder %v46, 24
    %v48 = vlaneseq
    %v49 = vshrl.u32 %v48, 7
    %v50 = vsub.s32 0, %v49
    %v51 = vrot.slane %v41, %v50
    %v52 = vsub.f32 %v40, %v51
    %v53 = vmul.f32 %v52, 10.0
    %v54 = vxor.u32 %v53, 2147483648
    %v55 = vmul.f32 %v54, 1.442695
    %v56 = vpow.pop %v55
    %v57 = vadd.f32 %v56, 1.0
    %v58 = vrcp.pop %v57
    %v59 = vmul.f32 1.0, %v58
    %v60 = vlaneseq
    %v61 = vshrl.u32 %v60, 7
    %v62 = vsub.s32 1, %v61
    %v63 = vrot.slane %v41, %v62
    %v64 = vsub.f32 %v40, %v63
    %v65 = vmul.f32 %v64, 10.0
    %v66 = vxor.u32 %v65, 2147483648
    %v67 = vmul.f32 %v66, 1.442695
    %v68 = vpow.pop %v67
    %v69 = vadd.f32 %v68, 1.0
    %v70 = vrcp.pop %v69
    %v71 = vmul.f32 1.0, %v70
    %v72 = vlaneseq
    %v73 = vshrl.u32 %v72, 7
    %v74 = vsub.s32 2, %v73
    %v75 = vrot.slane %v41, %v74
    %v76 = vsub.f32 %v40, %v75
    %v77 = vmul.f32 %v76, 10.0
    %v78 = vxor.u32 %v77, 2147483648
    %v79 = vmul.f32 %v78, 1.442695
    %v80 = vpow.pop %v79
    %v81 = vadd.f32 %v80, 1.0
    %v82 = vrcp.pop %v81
    %v83 = vmul.f32 1.0, %v82
    %v84 = vsub.f32 1.0, %v59
    %v85 = vmul.f32 %v84, 10.0
    %v86 = vmul.f32 %v85, 1.442695
    %v87 = vpow.pop %v86
    %v88 = vsub.f32 %v59, %v71
    %v89 = vmul.f32 %v88, 10.0
    %v90 = vmul.f32 %v89, 1.442695
    %v91 = vpow.pop %v90
    %v92 = vsub.f32 %v71, %v83
    %v93 = vmul.f32 %v92, 10.0
    %v94 = vmul.f32 %v93, 1.442695
    %v95 = vpow.pop %v94
    %v96 = vmul.f32 %v83, 10.0
    %v97 = vmul.f32 %v96, 1.442695
    %v98 = vpow.pop %v97
    %v99 = vadd.f32 %v87, %v91
    %v100 = vadd.f32 %v99, %v95
    %v101 = vadd.f32 %v100, %v98
    %v102 = vrcp.pop %v101
    %v103 = vmul.f32 %v95, 2.0
    %v104 = vadd.f32 %v91, %v103
    %v105 = vmul.f32 %v98, 3.0
    %v106 = vadd.f32 %v104, %v105
    %v107 = vmul.f32 %v106, %v102
    %v109 = vlaneseq
    %v110 = vshrl.u32 %v109, 7
    %v111 = vsub.s32 0, %v110
    %v112 = vrot.slane %v42, %v111
    %v114 = vsub.f32 %v40, %v112
    %v115 = vmul.f32 %v114, 10.0
    %v116 = vxor.u32 %v115, 2147483648
    %v117 = vmul.f32 %v116, 1.442695
    %v118 = vpow.pop %v117
    %v119 = vadd.f32 %v118, 1.0
    %v120 = vrcp.pop %v119
    %v121 = vmul.f32 1.0, %v120
    %v122 = vsel %vm47, %v107, %v121
    %vm123 = vcmask 261120
    %124 = vst.msk [vmem:[#allocation7] sm:$0xff] %vm123, %v122
    // Predicated region
    $region22: #{tpu_custom_call.1} parent=1 // pred_check
      _
    $region23: #{tpu_custom_call.1} parent=1 // pred_check_branch
      %126 = sbr.rel (0) target = $region25
    $region24: #{tpu_custom_call.1} parent=1 // pred_region
      %s128 = ssub.s32 128, 128
      %129 = vsyncadd [#allocation4], %s128
      %s131 = sshll.u32 [#allocation7], 4
      %s132 = int_to_ptr.vmem [resolvable:$true] %s131
      %134 = dma.vmem_to_hbm [thread:$0]  %s132, 128, %s3, [#allocation4]
    $region25: #{tpu_custom_call.1} parent=1 // pred_fallthru
      _
    // Predicated region
    $region26: #{tpu_custom_call.1} parent=1 // pred_check
      _
    $region27: #{tpu_custom_call.1} parent=1 // pred_check_branch
      %136 = sbr.rel (0) target = $region29
    $region28: #{tpu_custom_call.1} parent=1 // pred_region
      %137 = dma.done [#allocation4], 128
    $region29: #{tpu_custom_call.1} parent=1 // pred_fallthru
      _
    %138 = vsyncpa [#allocation3], 1
    %139 = vsyncpa [#allocation6], 1
    %140 = vsyncpa [#allocation4], 1

</llo_original>
